<compile_context>
chip_gen: v7x
topology: tpu7x:2x2x1
jax: 0.10.0
libtpu: 0.0.40
codegen_flags: <defaults>
</compile_context>

<pallas_src>
import functools

import jax
import jax.numpy as jnp
from jax.experimental import pallas as pl
from jax.experimental.pallas import tpu as pltpu


def _forward_kernel(mu_ref, ls_ref, a_ref,
                    w1m_ref, w1s_ref, w1a_ref, w2_ref, wmu_ref, wsig_ref,
                    bias_ref,
                    mu_out_ref, sig_out_ref):
    # Static dims derived from the (static) ref shapes.
    h1 = w2_ref.shape[0]
    h2 = w2_ref.shape[1]
    x_dim = wmu_ref.shape[1]

    # Packed per-feature bias rows (zero padded to a common width; slices start
    # at lane 0 so no lane rotation is needed).
    b1 = bias_ref[0:1, :h1]
    b2 = bias_ref[1:2, :h2]
    bmu = bias_ref[2:3, :x_dim]
    bsig = bias_ref[3:4, :x_dim]

    # ---- shared layer 1: three partial dots against pre-split W1 row blocks
    #      (replaces the wrapper-side concat of xa), f32 accumulation ----
    h = (jnp.dot(mu_ref[...], w1m_ref[...], preferred_element_type=jnp.float32)
         + jnp.dot(ls_ref[...], w1s_ref[...], preferred_element_type=jnp.float32)
         + jnp.dot(a_ref[...], w1a_ref[...], preferred_element_type=jnp.float32)
         + b1)
    h = jnp.maximum(h, 0.0)

    # ---- shared layer 2: Linear + ReLU ----
    h = jnp.dot(h, w2_ref[...], preferred_element_type=jnp.float32) + b2
    h = jnp.maximum(h, 0.0)

    # ---- heads: two small dots, written straight to the two outputs ----
    mu_out = jnp.dot(h, wmu_ref[...], preferred_element_type=jnp.float32) + bmu
    mu_out_ref[...] = mu_out.astype(mu_out_ref.dtype)

    sig_out = jnp.dot(h, wsig_ref[...], preferred_element_type=jnp.float32) + bsig
    sig_out_ref[...] = jnp.maximum(sig_out, 0.0).astype(sig_out_ref.dtype)


def _detect_num_tensorcores():
    """Best-effort TensorCores-per-chip query (v7x has 2, v5e/v6e have 1)."""
    try:
        info = pltpu.get_tpu_info()
        for attr in ("num_cores", "num_tensorcores", "tensorcore_count",
                     "cores_per_chip"):
            v = getattr(info, attr, None)
            if isinstance(v, int) and v > 0:
                return v
    except Exception:
        pass
    return 1


def _choose_batch_tile(B, num_cores=1):
    """Batch tile: full tile for small/medium B on single-TC chips, >=num_cores
    grid steps on multi-TC chips, ~2K-row tiles (multiple of 8) for large B."""
    n_tiles = 1
    if num_cores > 1 and B >= 16:
        n_tiles = num_cores
    min_tiles = pl.cdiv(B, 2048)
    if min_tiles > n_tiles:
        n_tiles = min_tiles
        if num_cores > 1:
            n_tiles = pl.cdiv(n_tiles, num_cores) * num_cores
    bt = pl.cdiv(B, n_tiles)
    bt = ((bt + 7) // 8) * 8          # sublane multiple when tiled
    if bt >= B:
        return B                      # single full tile (any B allowed)
    return bt


def prepare_params(params, x_dim, a_dim):
    """One-time parameter prep (hoisted out of the per-call forward path):
    split W1 into the three row blocks matching (mu, log_sigma, a) and pack
    the four bias vectors into one zero-padded (4, Hmax) array."""
    w1, b1, w2, b2, wmu, bmu, wsig, bsig = [jnp.asarray(p, jnp.float32) for p in params]
    assert w1.shape[0] == 2 * x_dim + a_dim
    w1m = w1[:x_dim]
    w1s = w1[x_dim:2 * x_dim]
    w1a = w1[2 * x_dim:]

    h1, h2 = w1.shape[1], w2.shape[1]
    hmax = max(h1, h2, x_dim)
    pad = lambda v: jnp.pad(v, (0, hmax - v.shape[0]))
    bias = jnp.stack([pad(b1), pad(b2), pad(bmu), pad(bsig)], axis=0)  # (4, hmax)

    return (w1m, w1s, w1a, w2, wmu, wsig, bias)


@functools.partial(jax.jit, static_argnames=("num_cores",))
def forward_model_sigma_input_output(mu_t, log_sigma_t, a_t, prepped, num_cores=1):
    """Forward pass: one fused Pallas kernel, no wrapper-side concat/slice."""
    w1m, w1s, w1a, w2, wmu, wsig, bias = prepped

    B, x_dim = mu_t.shape
    a_dim = a_t.shape[1]
    h1, h2 = w2.shape
    nb, hmax = bias.shape

    mu_t = mu_t.astype(jnp.float32)
    log_sigma_t = log_sigma_t.astype(jnp.float32)
    a_t = a_t.astype(jnp.float32)

    # Rows are fully independent (no BatchNorm), so a "parallel" batch grid is
    # exact; tail tiles are Pallas-padded and the extra rows are dropped on write.
    bt = _choose_batch_tile(B, num_cores)
    grid = (pl.cdiv(B, bt),)

    mu_tp1, log_sigma_tp1 = pl.pallas_call(
        _forward_kernel,
        out_shape=(jax.ShapeDtypeStruct((B, x_dim), jnp.float32),
                   jax.ShapeDtypeStruct((B, x_dim), jnp.float32)),
        grid_spec=pltpu.PrefetchScalarGridSpec(
            num_scalar_prefetch=0,
            grid=grid,
            in_specs=[
                pl.BlockSpec((bt, x_dim), lambda i: (i, 0)),    # mu_t (batch-tiled)
                pl.BlockSpec((bt, x_dim), lambda i: (i, 0)),    # log_sigma_t
                pl.BlockSpec((bt, a_dim), lambda i: (i, 0)),    # a_t
                pl.BlockSpec((x_dim, h1), lambda i: (0, 0)),    # W1[mu rows]
                pl.BlockSpec((x_dim, h1), lambda i: (0, 0)),    # W1[log_sigma rows]
                pl.BlockSpec((a_dim, h1), lambda i: (0, 0)),    # W1[a rows]
                pl.BlockSpec((h1, h2), lambda i: (0, 0)),       # W2
                pl.BlockSpec((h2, x_dim), lambda i: (0, 0)),    # W_mu
                pl.BlockSpec((h2, x_dim), lambda i: (0, 0)),    # W_sigma
                pl.BlockSpec((nb, hmax), lambda i: (0, 0)),     # packed biases
            ],
            out_specs=[
                pl.BlockSpec((bt, x_dim), lambda i: (i, 0)),    # mu_tp1
                pl.BlockSpec((bt, x_dim), lambda i: (i, 0)),    # log_sigma_tp1
            ],
        ),
        compiler_params=pltpu.CompilerParams(
            dimension_semantics=("parallel",),
            vmem_limit_bytes=32 * 1024 * 1024,
        ),
    )(mu_t, log_sigma_t, a_t, w1m, w1s, w1a, w2, wmu, wsig, bias)

    return mu_tp1, log_sigma_tp1


def init_params(key, x_dim, a_dim, hidden_dim=(32, 32)):
    """Deterministic init mirroring PyTorch nn.Linear defaults
    (U(-1/sqrt(fan_in), 1/sqrt(fan_in)) for weights and biases)."""
    in_dim = 2 * x_dim + a_dim
    h1, h2 = hidden_dim
    keys = jax.random.split(key, 4)

    def linear(k, fan_in, fan_out):
        kw, kb = jax.random.split(k)
        bound = 1.0 / jnp.sqrt(fan_in)
        w = jax.random.uniform(kw, (fan_in, fan_out), jnp.float32, -bound, bound)
        b = jax.random.uniform(kb, (fan_out,), jnp.float32, -bound, bound)
        return w, b

    w1, b1 = linear(keys[0], in_dim, h1)
    w2, b2 = linear(keys[1], h1, h2)
    wmu, bmu = linear(keys[2], h2, x_dim)
    wsig, bsig = linear(keys[3], h2, x_dim)
    return (w1, b1, w2, b2, wmu, bmu, wsig, bsig)


def _reference_jax(mu_t, log_sigma_t, a_t, params):
    """Plain-JAX reference for a correctness cross-check."""
    w1, b1, w2, b2, wmu, bmu, wsig, bsig = params
    xa = jnp.concatenate([mu_t, log_sigma_t, a_t], axis=1)
    h = jnp.maximum(xa @ w1 + b1, 0.0)
    h = jnp.maximum(h @ w2 + b2, 0.0)
    mu = h @ wmu + bmu
    sig = jnp.maximum(h @ wsig + bsig, 0.0)
    return mu, sig


# TODO(synk): apply_tensor_constraints (numpy->tensor coercion, 1-D unsqueeze,
# device moves) is host-side glue with no Pallas equivalent; inputs here are
# assumed to already be (B, feature) float32 arrays.

if __name__ == "__main__":
    # Small shapes consistent with the module: 1-D state and action dims.
    batch = 8
    x_dim, a_dim = 16, 8
    hidden_dim = (32, 32)

    key = jax.random.PRNGKey(0)
    kmu, ksig, ka, kp = jax.random.split(key, 4)
    mu_t = jax.random.normal(kmu, (batch, x_dim), jnp.float32)
    log_sigma_t = jax.random.normal(ksig, (batch, x_dim), jnp.float32)
    a_t = jax.random.normal(ka, (batch, a_dim), jnp.float32)

    params = init_params(kp, x_dim, a_dim, hidden_dim)
    prepped = prepare_params(params, x_dim, a_dim)        # one-time prep (hoisted)
    num_cores = _detect_num_tensorcores()

    mu_tp1, log_sigma_tp1 = forward_model_sigma_input_output(
        mu_t, log_sigma_t, a_t, prepped, num_cores=num_cores)
    jax.block_until_ready((mu_tp1, log_sigma_tp1))

    # Cross-check against the plain-JAX reference.
    mu_ref, sig_ref = _reference_jax(mu_t, log_sigma_t, a_t, params)
    assert mu_tp1.shape == (batch, x_dim)
    assert log_sigma_tp1.shape == (batch, x_dim)
    assert jnp.allclose(mu_tp1, mu_ref, atol=1e-4, rtol=1e-4)
    assert jnp.allclose(log_sigma_tp1, sig_ref, atol=1e-4, rtol=1e-4)
    assert bool(jnp.all(log_sigma_tp1 >= 0.0))            # sigma head ends in ReLU

    # Exercise the multi-tile / tail path (also the v7x two-TC tiling branch):
    # B=20 with num_cores=2 -> bt=16, grid=(2,), padded tail rows dropped on write.
    b2 = 20
    k2 = jax.random.split(jax.random.PRNGKey(1), 3)
    mu2 = jax.random.normal(k2[0], (b2, x_dim), jnp.float32)
    ls2 = jax.random.normal(k2[1], (b2, x_dim), jnp.float32)
    a2 = jax.random.normal(k2[2], (b2, a_dim), jnp.float32)
    m2, s2 = forward_model_sigma_input_output(mu2, ls2, a2, prepped, num_cores=2)
    jax.block_until_ready((m2, s2))
    m2_ref, s2_ref = _reference_jax(mu2, ls2, a2, params)
    assert jnp.allclose(m2, m2_ref, atol=1e-4, rtol=1e-4)
    assert jnp.allclose(s2, s2_ref, atol=1e-4, rtol=1e-4)

    print("KERNEL_OK")
</pallas_src>

<mosaic_0001>
module attributes {stable_mosaic.version = 11 : i64} {
  func.func @_forward_kernel(%arg0: i32, %arg1: memref<8x16xf32, #tpu.memory_space<vmem>>, %arg2: memref<8x16xf32, #tpu.memory_space<vmem>>, %arg3: memref<8x8xf32, #tpu.memory_space<vmem>>, %arg4: memref<16x32xf32, #tpu.memory_space<vmem>>, %arg5: memref<16x32xf32, #tpu.memory_space<vmem>>, %arg6: memref<8x32xf32, #tpu.memory_space<vmem>>, %arg7: memref<32x32xf32, #tpu.memory_space<vmem>>, %arg8: memref<32x16xf32, #tpu.memory_space<vmem>>, %arg9: memref<32x16xf32, #tpu.memory_space<vmem>>, %arg10: memref<4x32xf32, #tpu.memory_space<vmem>>, %arg11: memref<8x16xf32, #tpu.memory_space<vmem>>, %arg12: memref<8x16xf32, #tpu.memory_space<vmem>>) attributes {dimension_semantics = [#tpu.dimension_semantics<parallel>], iteration_bounds = array<i64: 1>, scalar_prefetch = 0 : i64, scratch_operands = 0 : i64, tpu.core_type = #tpu.core_type<tc>, window_params = [{transform_indices = @transform_0, window_bounds = array<i64: 8, 16>}, {transform_indices = @transform_1, window_bounds = array<i64: 8, 16>}, {transform_indices = @transform_2, window_bounds = array<i64: 8, 8>}, {pipeline_mode = #tpu.pipeline_mode<synchronous>, transform_indices = @transform_3, window_bounds = array<i64: 16, 32>}, {pipeline_mode = #tpu.pipeline_mode<synchronous>, transform_indices = @transform_4, window_bounds = array<i64: 16, 32>}, {pipeline_mode = #tpu.pipeline_mode<synchronous>, transform_indices = @transform_5, window_bounds = array<i64: 8, 32>}, {pipeline_mode = #tpu.pipeline_mode<synchronous>, transform_indices = @transform_6, window_bounds = array<i64: 32, 32>}, {pipeline_mode = #tpu.pipeline_mode<synchronous>, transform_indices = @transform_7, window_bounds = array<i64: 32, 16>}, {pipeline_mode = #tpu.pipeline_mode<synchronous>, transform_indices = @transform_8, window_bounds = array<i64: 32, 16>}, {pipeline_mode = #tpu.pipeline_mode<synchronous>, transform_indices = @transform_9, window_bounds = array<i64: 4, 32>}, {transform_indices = @transform_10, window_bounds = array<i64: 8, 16>}, {transform_indices = @transform_11, window_bounds = array<i64: 8, 16>}]} {
    %c0 = arith.constant 0 : index
    %c0_0 = arith.constant 0 : index
    %0 = vector.load %arg10[%c0, %c0_0] : memref<4x32xf32, #tpu.memory_space<vmem>>, vector<1x32xf32>
    %c1 = arith.constant 1 : index
    %c0_1 = arith.constant 0 : index
    %1 = vector.load %arg10[%c1, %c0_1] : memref<4x32xf32, #tpu.memory_space<vmem>>, vector<1x32xf32>
    %c2 = arith.constant 2 : index
    %c0_2 = arith.constant 0 : index
    %2 = vector.load %arg10[%c2, %c0_2] : memref<4x32xf32, #tpu.memory_space<vmem>>, vector<1x16xf32>
    %c3 = arith.constant 3 : index
    %c0_3 = arith.constant 0 : index
    %3 = vector.load %arg10[%c3, %c0_3] : memref<4x32xf32, #tpu.memory_space<vmem>>, vector<1x16xf32>
    %c0_4 = arith.constant 0 : index
    %c0_5 = arith.constant 0 : index
    %4 = vector.load %arg1[%c0_4, %c0_5] : memref<8x16xf32, #tpu.memory_space<vmem>>, vector<8x16xf32>
    %c0_6 = arith.constant 0 : index
    %c0_7 = arith.constant 0 : index
    %5 = vector.load %arg4[%c0_6, %c0_7] : memref<16x32xf32, #tpu.memory_space<vmem>>, vector<16x32xf32>
    %cst = arith.constant dense<0.000000e+00> : vector<8x32xf32>
    %6 = tpu.matmul %4, %5, %cst {dimension_numbers = #tpu.dot_dimension_numbers<[1], [0], [0], [1], [0, 0, 1, 1], [], []>} : vector<8x16xf32>, vector<16x32xf32>, vector<8x32xf32> -> vector<8x32xf32>
    %c0_8 = arith.constant 0 : index
    %c0_9 = arith.constant 0 : index
    %7 = vector.load %arg2[%c0_8, %c0_9] : memref<8x16xf32, #tpu.memory_space<vmem>>, vector<8x16xf32>
    %c0_10 = arith.constant 0 : index
    %c0_11 = arith.constant 0 : index
    %8 = vector.load %arg5[%c0_10, %c0_11] : memref<16x32xf32, #tpu.memory_space<vmem>>, vector<16x32xf32>
    %cst_12 = arith.constant dense<0.000000e+00> : vector<8x32xf32>
    %9 = tpu.matmul %7, %8, %cst_12 {dimension_numbers = #tpu.dot_dimension_numbers<[1], [0], [0], [1], [0, 0, 1, 1], [], []>} : vector<8x16xf32>, vector<16x32xf32>, vector<8x32xf32> -> vector<8x32xf32>
    %10 = arith.addf %6, %9 : vector<8x32xf32>
    %c0_13 = arith.constant 0 : index
    %c0_14 = arith.constant 0 : index
    %11 = vector.load %arg3[%c0_13, %c0_14] : memref<8x8xf32, #tpu.memory_space<vmem>>, vector<8x8xf32>
    %c0_15 = arith.constant 0 : index
    %c0_16 = arith.constant 0 : index
    %12 = vector.load %arg6[%c0_15, %c0_16] : memref<8x32xf32, #tpu.memory_space<vmem>>, vector<8x32xf32>
    %cst_17 = arith.constant dense<0.000000e+00> : vector<8x32xf32>
    %13 = tpu.matmul %11, %12, %cst_17 {dimension_numbers = #tpu.dot_dimension_numbers<[1], [0], [0], [1], [0, 0, 1, 1], [], []>} : vector<8x8xf32>, vector<8x32xf32>, vector<8x32xf32> -> vector<8x32xf32>
    %14 = arith.addf %10, %13 : vector<8x32xf32>
    %15 = vector.broadcast %0 : vector<1x32xf32> to vector<8x32xf32>
    %16 = arith.addf %14, %15 : vector<8x32xf32>
    %cst_18 = arith.constant 0.000000e+00 : f32
    %17 = vector.broadcast %cst_18 : f32 to vector<8x32xf32>
    %18 = arith.maximumf %16, %17 : vector<8x32xf32>
    %c0_19 = arith.constant 0 : index
    %c0_20 = arith.constant 0 : index
    %19 = vector.load %arg7[%c0_19, %c0_20] : memref<32x32xf32, #tpu.memory_space<vmem>>, vector<32x32xf32>
    %cst_21 = arith.constant dense<0.000000e+00> : vector<8x32xf32>
    %20 = tpu.matmul %18, %19, %cst_21 {dimension_numbers = #tpu.dot_dimension_numbers<[1], [0], [0], [1], [0, 0, 1, 1], [], []>} : vector<8x32xf32>, vector<32x32xf32>, vector<8x32xf32> -> vector<8x32xf32>
    %21 = vector.broadcast %1 : vector<1x32xf32> to vector<8x32xf32>
    %22 = arith.addf %20, %21 : vector<8x32xf32>
    %cst_22 = arith.constant 0.000000e+00 : f32
    %23 = vector.broadcast %cst_22 : f32 to vector<8x32xf32>
    %24 = arith.maximumf %22, %23 : vector<8x32xf32>
    %c0_23 = arith.constant 0 : index
    %c0_24 = arith.constant 0 : index
    %25 = vector.load %arg8[%c0_23, %c0_24] : memref<32x16xf32, #tpu.memory_space<vmem>>, vector<32x16xf32>
    %cst_25 = arith.constant dense<0.000000e+00> : vector<8x16xf32>
    %26 = tpu.matmul %24, %25, %cst_25 {dimension_numbers = #tpu.dot_dimension_numbers<[1], [0], [0], [1], [0, 0, 1, 1], [], []>} : vector<8x32xf32>, vector<32x16xf32>, vector<8x16xf32> -> vector<8x16xf32>
    %27 = vector.broadcast %2 : vector<1x16xf32> to vector<8x16xf32>
    %28 = arith.addf %26, %27 : vector<8x16xf32>
    %c0_26 = arith.constant 0 : index
    %c0_27 = arith.constant 0 : index
    %29 = vector.load %arg11[%c0_26, %c0_27] : memref<8x16xf32, #tpu.memory_space<vmem>>, vector<8x16xf32>
    tpu.vector_store %arg11[%c0_26, %c0_27], %28 {strides = array<i32>} : memref<8x16xf32, #tpu.memory_space<vmem>>, vector<8x16xf32>,
    %c0_28 = arith.constant 0 : index
    %c0_29 = arith.constant 0 : index
    %30 = vector.load %arg9[%c0_28, %c0_29] : memref<32x16xf32, #tpu.memory_space<vmem>>, vector<32x16xf32>
    %cst_30 = arith.constant dense<0.000000e+00> : vector<8x16xf32>
    %31 = tpu.matmul %24, %30, %cst_30 {dimension_numbers = #tpu.dot_dimension_numbers<[1], [0], [0], [1], [0, 0, 1, 1], [], []>} : vector<8x32xf32>, vector<32x16xf32>, vector<8x16xf32> -> vector<8x16xf32>
    %32 = vector.broadcast %3 : vector<1x16xf32> to vector<8x16xf32>
    %33 = arith.addf %31, %32 : vector<8x16xf32>
    %cst_31 = arith.constant 0.000000e+00 : f32
    %34 = vector.broadcast %cst_31 : f32 to vector<8x16xf32>
    %35 = arith.maximumf %33, %34 : vector<8x16xf32>
    %c0_32 = arith.constant 0 : index
    %c0_33 = arith.constant 0 : index
    %36 = vector.load %arg12[%c0_32, %c0_33] : memref<8x16xf32, #tpu.memory_space<vmem>>, vector<8x16xf32>
    tpu.vector_store %arg12[%c0_32, %c0_33], %35 {strides = array<i32>} : memref<8x16xf32, #tpu.memory_space<vmem>>, vector<8x16xf32>,
    return
  }
  func.func @transform_0(%arg0: i32) -> (i32, i32) {
    %c0_i32 = arith.constant 0 : i32
    %c0_i32_0 = arith.constant 0 : i32
    return %arg0, %c0_i32 : i32, i32
  }
  func.func @transform_1(%arg0: i32) -> (i32, i32) {
    %c0_i32 = arith.constant 0 : i32
    %c0_i32_0 = arith.constant 0 : i32
    return %arg0, %c0_i32 : i32, i32
  }
  func.func @transform_2(%arg0: i32) -> (i32, i32) {
    %c0_i32 = arith.constant 0 : i32
    %c0_i32_0 = arith.constant 0 : i32
    return %arg0, %c0_i32 : i32, i32
  }
  func.func @transform_3(%arg0: i32) -> (i32, i32) {
    %c0_i32 = arith.constant 0 : i32
    %c0_i32_0 = arith.constant 0 : i32
    %c0_i32_1 = arith.constant 0 : i32
    return %c0_i32, %c0_i32_0 : i32, i32
  }
  func.func @transform_4(%arg0: i32) -> (i32, i32) {
    %c0_i32 = arith.constant 0 : i32
    %c0_i32_0 = arith.constant 0 : i32
    %c0_i32_1 = arith.constant 0 : i32
    return %c0_i32, %c0_i32_0 : i32, i32
  }
  func.func @transform_5(%arg0: i32) -> (i32, i32) {
    %c0_i32 = arith.constant 0 : i32
    %c0_i32_0 = arith.constant 0 : i32
    %c0_i32_1 = arith.constant 0 : i32
    return %c0_i32, %c0_i32_0 : i32, i32
  }
  func.func @transform_6(%arg0: i32) -> (i32, i32) {
    %c0_i32 = arith.constant 0 : i32
    %c0_i32_0 = arith.constant 0 : i32
    %c0_i32_1 = arith.constant 0 : i32
    return %c0_i32, %c0_i32_0 : i32, i32
  }
  func.func @transform_7(%arg0: i32) -> (i32, i32) {
    %c0_i32 = arith.constant 0 : i32
    %c0_i32_0 = arith.constant 0 : i32
    %c0_i32_1 = arith.constant 0 : i32
    return %c0_i32, %c0_i32_0 : i32, i32
  }
  func.func @transform_8(%arg0: i32) -> (i32, i32) {
    %c0_i32 = arith.constant 0 : i32
    %c0_i32_0 = arith.constant 0 : i32
    %c0_i32_1 = arith.constant 0 : i32
    return %c0_i32, %c0_i32_0 : i32, i32
  }
  func.func @transform_9(%arg0: i32) -> (i32, i32) {
    %c0_i32 = arith.constant 0 : i32
    %c0_i32_0 = arith.constant 0 : i32
    %c0_i32_1 = arith.constant 0 : i32
    return %c0_i32, %c0_i32_0 : i32, i32
  }
  func.func @transform_10(%arg0: i32) -> (i32, i32) {
    %c0_i32 = arith.constant 0 : i32
    %c0_i32_0 = arith.constant 0 : i32
    return %arg0, %c0_i32 : i32, i32
  }
  func.func @transform_11(%arg0: i32) -> (i32, i32) {
    %c0_i32 = arith.constant 0 : i32
    %c0_i32_0 = arith.constant 0 : i32
    return %arg0, %c0_i32 : i32, i32
  }
}

</mosaic_0001>

<llo_original>
// kernel: forward_model_sigma_input_output.1
$region0: #{forward_model_sigma_input_output.1}
  #allocation0 [shape = 'u32[]', space=smem, size = 0x4, offset = 0x4, fixed_abs, tag = 'smem constant byte address 0x4 - core index']
  #allocation1 [shape = 'u32[144,128]{1,0:T(1,128)}', space=vmem, size = 0x12000, scoped, tag = 'internal scratch']
  %s0 = inlined_call_operand.vmem [shape: f32[8,16], index: 0, kind: input, shape index: {}]
  %s1 = inlined_call_operand.vmem [shape: f32[8,16], index: 1, kind: input, shape index: {}]
  %s2 = inlined_call_operand.hbm [shape: f32[8,8], index: 2, kind: input, shape index: {}]
  %s3 = inlined_call_operand.vmem [shape: f32[16,32], index: 3, kind: input, shape index: {}]
  %s4 = inlined_call_operand.vmem [shape: f32[16,32], index: 4, kind: input, shape index: {}]
  %s5 = inlined_call_operand.vmem [shape: f32[8,32], index: 5, kind: input, shape index: {}]
  %s6 = inlined_call_operand.vmem [shape: f32[32,32], index: 6, kind: input, shape index: {}]
  %s7 = inlined_call_operand.vmem [shape: f32[32,16], index: 7, kind: input, shape index: {}]
  %s8 = inlined_call_operand.vmem [shape: f32[32,16], index: 8, kind: input, shape index: {}]
  %s9 = inlined_call_operand.vmem [shape: f32[4,32], index: 9, kind: input, shape index: {}]
  %s10 = inlined_call_operand.hbm [shape: f32[8,16], index: 10, kind: output, shape index: {0}]
  %s11 = inlined_call_operand.hbm [shape: f32[8,16], index: 11, kind: output, shape index: {1}]
  %12 = xla_tuple %s10, %s11
  %s13 = sld [smem:[#allocation0]]
  $region62: #{forward_model_sigma_input_output.1} parent=0
    _
  %s15 = ssub.s32 1, %s13
  %s16 = scalar_select 0, %s15, %s13
  $region1: #{forward_model_sigma_input_output.1} parent=0
    #allocation2 [shape = 'u8[4096]{0}', space=vmem, size = 0x1000, scoped, tag = 'input window, operand 2, single buffered']
    #allocation3 [shape = 's32[1]{0}', space=sflag, size = 0x4, scoped, tag = 'scoped memory for forward_model_sigma_input_output.1']
    #allocation4 [shape = 's32[1]{0}', space=sflag, size = 0x4, scoped, tag = 'scoped memory for forward_model_sigma_input_output.1']
    #allocation5 [shape = 'u8[4096]{0}', space=vmem, size = 0x1000, scoped, tag = 'output window, operand 0, single buffered']
    #allocation6 [shape = 'u8[4096]{0}', space=vmem, size = 0x1000, scoped, tag = 'output window, operand 1, single buffered']
    #allocation7 [shape = 's32[1]{0}', space=sflag, size = 0x4, scoped, tag = 'scoped memory for forward_model_sigma_input_output.1']
    %17 = vsyncpa [#allocation3], 0
    %18 = vsyncpa [#allocation4], 0
    %19 = vsyncpa [#allocation7], 0
    // Predicated region
    $region2: #{forward_model_sigma_input_output.1} parent=1 // pred_check
      _
    $region3: #{forward_model_sigma_input_output.1} parent=1 // pred_check_branch
      %21 = sbr.rel (0) target = $region5
    $region4: #{forward_model_sigma_input_output.1} parent=1 // pred_region
      _
    $region5: #{forward_model_sigma_input_output.1} parent=1 // pred_fallthru
      _
    // Predicated region
    $region6: #{forward_model_sigma_input_output.1} parent=1 // pred_check
      _
    $region7: #{forward_model_sigma_input_output.1} parent=1 // pred_check_branch
      %23 = sbr.rel (0) target = $region9
    $region8: #{forward_model_sigma_input_output.1} parent=1 // pred_region
      _
    $region9: #{forward_model_sigma_input_output.1} parent=1 // pred_fallthru
      _
    // Predicated region
    $region10: #{forward_model_sigma_input_output.1} parent=1 // pred_check
      _
    $region11: #{forward_model_sigma_input_output.1} parent=1 // pred_check_branch
      %25 = sbr.rel (0) target = $region13
    $region12: #{forward_model_sigma_input_output.1} parent=1 // pred_region
      %s27 = ssub.s32 128, 128
      %28 = vsyncadd [#allocation3], %s27
      %s30 = sshll.u32 [#allocation2], 4
      %s31 = int_to_ptr.vmem [resolvable:$true] %s30
      %33 = dma.hbm_to_vmem [thread:$0]  %s2, 128, %s31, [#allocation3]
    $region13: #{forward_model_sigma_input_output.1} parent=1 // pred_fallthru
      _
    // Predicated region
    $region14: #{forward_model_sigma_input_output.1} parent=1 // pred_check
      _
    $region15: #{forward_model_sigma_input_output.1} parent=1 // pred_check_branch
      %35 = sbr.rel (0) target = $region17
    $region16: #{forward_model_sigma_input_output.1} parent=1 // pred_region
      _
    $region17: #{forward_model_sigma_input_output.1} parent=1 // pred_fallthru
      _
    // Predicated region
    $region18: #{forward_model_sigma_input_output.1} parent=1 // pred_check
      _
    $region19: #{forward_model_sigma_input_output.1} parent=1 // pred_check_branch
      %37 = sbr.rel (0) target = $region21
    $region20: #{forward_model_sigma_input_output.1} parent=1 // pred_region
      _
    $region21: #{forward_model_sigma_input_output.1} parent=1 // pred_fallthru
      _
    // Predicated region
    $region22: #{forward_model_sigma_input_output.1} parent=1 // pred_check
      _
    $region23: #{forward_model_sigma_input_output.1} parent=1 // pred_check_branch
      %39 = sbr.rel (0) target = $region25
    $region24: #{forward_model_sigma_input_output.1} parent=1 // pred_region
      _
    $region25: #{forward_model_sigma_input_output.1} parent=1 // pred_fallthru
      _
    // Predicated region
    $region26: #{forward_model_sigma_input_output.1} parent=1 // pred_check
      _
    $region27: #{forward_model_sigma_input_output.1} parent=1 // pred_check_branch
      %41 = sbr.rel (0) target = $region29
    $region28: #{forward_model_sigma_input_output.1} parent=1 // pred_region
      _
    $region29: #{forward_model_sigma_input_output.1} parent=1 // pred_fallthru
      _
    // Predicated region
    $region30: #{forward_model_sigma_input_output.1} parent=1 // pred_check
      _
    $region31: #{forward_model_sigma_input_output.1} parent=1 // pred_check_branch
      %43 = sbr.rel (0) target = $region33
    $region32: #{forward_model_sigma_input_output.1} parent=1 // pred_region
      _
    $region33: #{forward_model_sigma_input_output.1} parent=1 // pred_fallthru
      _
    // Predicated region
    $region34: #{forward_model_sigma_input_output.1} parent=1 // pred_check
      _
    $region35: #{forward_model_sigma_input_output.1} parent=1 // pred_check_branch
      %45 = sbr.rel (0) target = $region37
    $region36: #{forward_model_sigma_input_output.1} parent=1 // pred_region
      _
    $region37: #{forward_model_sigma_input_output.1} parent=1 // pred_fallthru
      _
    // Predicated region
    $region38: #{forward_model_sigma_input_output.1} parent=1 // pred_check
      _
    $region39: #{forward_model_sigma_input_output.1} parent=1 // pred_check_branch
      %47 = sbr.rel (0) target = $region41
    $region40: #{forward_model_sigma_input_output.1} parent=1 // pred_region
      _
    $region41: #{forward_model_sigma_input_output.1} parent=1 // pred_fallthru
      _
    // Predicated region
    $region42: #{forward_model_sigma_input_output.1} parent=1 // pred_check
      _
    $region43: #{forward_model_sigma_input_output.1} parent=1 // pred_check_branch
      %49 = sbr.rel (0) target = $region45
    $region44: #{forward_model_sigma_input_output.1} parent=1 // pred_region
      %50 = dma.done [#allocation3], 128
    $region45: #{forward_model_sigma_input_output.1} parent=1 // pred_fallthru
      _
    %v51 = vld [vmem:[%s9] sm:$0x1]
    %v52 = vld [vmem:[%s9 + $0x1] sm:$0x1]
    %v53 = vld [vmem:[%s9 + $0x2] sm:$0x1]
    %v54 = vld [vmem:[%s9 + $0x3] sm:$0x1]
    %v55 = vld [vmem:[%s0] sm:$0xff]
    %v56 = vld [vmem:[%s3] sm:$0xff]
    %v57 = vld [vmem:[%s3 + $0x8] sm:$0xff]
    %v58 = vld [vmem:[%s1] sm:$0xff]
    %v59 = vld [vmem:[%s4] sm:$0xff]
    %v60 = vld [vmem:[%s4 + $0x8] sm:$0xff]
    %vm61 = vcmask 130048
    %v63 = vsel %vm61, %v58, 0
    %65 = vmatprep.subr.mxu0 0.0
    %66 = vmatpush1.msra.mxu0 %v59
    %67 = vmatprep.subr.mxu0 0.0
    %68 = vmatpush1.msra.mxu0 %v60
    %69 = vmatprep.subr.mxu0 0.0
    %70 = vmatpush1.msra.mxu0 0.0
    %71 = vmatprep.subr.mxu0 0.0
    %72 = vmatpush1.msra.mxu0 0.0
    %73 = vmatprep.subr.mxu0 0.0
    %74 = vmatpush1.msra.mxu0 0.0
    %75 = vmatprep.subr.mxu0 0.0
    %76 = vmatpush1.msra.mxu0 0.0
    %77 = vmatprep.subr.mxu0 0.0
    %78 = vmatpush1.msra.mxu0 0.0
    %79 = vmatprep.subr.mxu0 0.0
    %80 = vmatpush1.msra.mxu0 0.0
    %81 = vmatprep.subr.mxu0 0.0
    %82 = vmatpush1.msra.mxu0 0.0
    %83 = vmatprep.subr.mxu0 0.0
    %84 = vmatpush1.msra.mxu0 0.0
    %85 = vmatprep.subr.mxu0 0.0
    %86 = vmatpush1.msra.mxu0 0.0
    %87 = vmatprep.subr.mxu0 0.0
    %88 = vmatpush1.msra.mxu0 0.0
    %89 = vmatprep.subr.mxu0 0.0
    %90 = vmatpush1.msra.mxu0 0.0
    %91 = vmatprep.subr.mxu0 0.0
    %92 = vmatpush1.msra.mxu0 0.0
    %93 = vmatprep.subr.mxu0 0.0
    %94 = vmatpush1.msra.mxu0 0.0
    %95 = vmatprep.subr.mxu0 0.0
    %96 = vmatpush1.msra.mxu0 0.0
    %97 = vmatprep.subr.mxu0 0.0
    %98 = vmatpush1.msra.mxu0 0.0
    %99 = vmatprep.subr.mxu0 0.0
    %100 = vmatpush1.msra.mxu0 0.0
    %101 = vmatprep.subr.mxu0 0.0
    %102 = vmatpush1.msra.mxu0 0.0
    %103 = vmatprep.subr.mxu0 0.0
    %104 = vmatpush1.msra.mxu0 0.0
    %105 = vmatprep.subr.mxu0 0.0
    %106 = vmatpush1.msra.mxu0 0.0
    %107 = vmatprep.subr.mxu0 0.0
    %108 = vmatpush1.msra.mxu0 0.0
    %109 = vmatprep.subr.mxu0 0.0
    %110 = vmatpush1.msra.mxu0 0.0
    %111 = vmatprep.subr.mxu0 0.0
    %112 = vmatpush1.msra.mxu0 0.0
    %113 = vmatprep.subr.mxu0 0.0
    %114 = vmatpush1.msra.mxu0 0.0
    %115 = vmatprep.subr.mxu0 0.0
    %116 = vmatpush1.msra.mxu0 0.0
    %117 = vmatprep.subr.mxu0 0.0
    %118 = vmatpush1.msra.mxu0 0.0
    %119 = vmatprep.subr.mxu0 0.0
    %120 = vmatpush1.msra.mxu0 0.0
    %121 = vmatprep.subr.mxu0 0.0
    %122 = vmatpush1.msra.mxu0 0.0
    %123 = vmatprep.subr.mxu0 0.0
    %124 = vmatpush1.msra.mxu0 0.0
    %125 = vmatprep.subr.mxu0 0.0
    %126 = vmatpush1.msra.mxu0 0.0
    %127 = vmatprep.subr.mxu0 0.0
    %128 = vmatpush1.msra.mxu0 0.0
    %129 = vmatprep.mubr.f32.mxu0 0.0
    %130 = vmatmul.mubr.f32.gmra.mrb[0].mxu0 %v63
    %v131 = vpop.f32.mrb[0].mxu0
    %v132 = vadd.f32 0.0, %v131
    %v133 = vpop.f32.mrb[0].mxu0
    %134 = vdwg.mxu0
    %v136 = vsel %vm61, %v55, 0
    %138 = vmatprep.subr.mxu0 0.0
    %139 = vmatpush1.msra.mxu0 %v56
    %140 = vmatprep.subr.mxu0 0.0
    %141 = vmatpush1.msra.mxu0 %v57
    %142 = vmatprep.subr.mxu0 0.0
    %143 = vmatpush1.msra.mxu0 0.0
    %144 = vmatprep.subr.mxu0 0.0
    %145 = vmatpush1.msra.mxu0 0.0
    %146 = vmatprep.subr.mxu0 0.0
    %147 = vmatpush1.msra.mxu0 0.0
    %148 = vmatprep.subr.mxu0 0.0
    %149 = vmatpush1.msra.mxu0 0.0
    %150 = vmatprep.subr.mxu0 0.0
    %151 = vmatpush1.msra.mxu0 0.0
    %152 = vmatprep.subr.mxu0 0.0
    %153 = vmatpush1.msra.mxu0 0.0
    %154 = vmatprep.subr.mxu0 0.0
    %155 = vmatpush1.msra.mxu0 0.0
    %156 = vmatprep.subr.mxu0 0.0
    %157 = vmatpush1.msra.mxu0 0.0
    %158 = vmatprep.subr.mxu0 0.0
    %159 = vmatpush1.msra.mxu0 0.0
    %160 = vmatprep.subr.mxu0 0.0
    %161 = vmatpush1.msra.mxu0 0.0
    %162 = vmatprep.subr.mxu0 0.0
    %163 = vmatpush1.msra.mxu0 0.0
    %164 = vmatprep.subr.mxu0 0.0
    %165 = vmatpush1.msra.mxu0 0.0
    %166 = vmatprep.subr.mxu0 0.0
    %167 = vmatpush1.msra.mxu0 0.0
    %168 = vmatprep.subr.mxu0 0.0
    %169 = vmatpush1.msra.mxu0 0.0
    %170 = vmatprep.subr.mxu0 0.0
    %171 = vmatpush1.msra.mxu0 0.0
    %172 = vmatprep.subr.mxu0 0.0
    %173 = vmatpush1.msra.mxu0 0.0
    %174 = vmatprep.subr.mxu0 0.0
    %175 = vmatpush1.msra.mxu0 0.0
    %176 = vmatprep.subr.mxu0 0.0
    %177 = vmatpush1.msra.mxu0 0.0
    %178 = vmatprep.subr.mxu0 0.0
    %179 = vmatpush1.msra.mxu0 0.0
    %180 = vmatprep.subr.mxu0 0.0
    %181 = vmatpush1.msra.mxu0 0.0
    %182 = vmatprep.subr.mxu0 0.0
    %183 = vmatpush1.msra.mxu0 0.0
    %184 = vmatprep.subr.mxu0 0.0
    %185 = vmatpush1.msra.mxu0 0.0
    %186 = vmatprep.subr.mxu0 0.0
    %187 = vmatpush1.msra.mxu0 0.0
    %188 = vmatprep.subr.mxu0 0.0
    %189 = vmatpush1.msra.mxu0 0.0
    %190 = vmatprep.subr.mxu0 0.0
    %191 = vmatpush1.msra.mxu0 0.0
    %192 = vmatprep.subr.mxu0 0.0
    %193 = vmatpush1.msra.mxu0 0.0
    %194 = vmatprep.subr.mxu0 0.0
    %195 = vmatpush1.msra.mxu0 0.0
    %196 = vmatprep.subr.mxu0 0.0
    %197 = vmatpush1.msra.mxu0 0.0
    %198 = vmatprep.subr.mxu0 0.0
    %199 = vmatpush1.msra.mxu0 0.0
    %200 = vmatprep.subr.mxu0 0.0
    %201 = vmatpush1.msra.mxu0 0.0
    %202 = vmatprep.mubr.f32.mxu0 0.0
    %203 = vmatmul.mubr.f32.gmra.mrb[0].mxu0 %v136
    %v204 = vpop.f32.mrb[0].mxu0
    %v205 = vadd.f32 %v132, %v204
    %v206 = vpop.f32.mrb[0].mxu0
    %207 = vdwg.mxu0
    %v208 = vld [vmem:[#allocation2] sm:$0xff]
    %v209 = vld [vmem:[%s5] sm:$0xff]
    %vm210 = vcmask 64512
    %v212 = vsel %vm210, %v208, 0
    %214 = vmatprep.subr.mxu0 0.0
    %215 = vmatpush1.msra.mxu0 %v209
    %216 = vmatprep.subr.mxu0 0.0
    %217 = vmatpush1.msra.mxu0 0.0
    %218 = vmatprep.subr.mxu0 0.0
    %219 = vmatpush1.msra.mxu0 0.0
    %220 = vmatprep.subr.mxu0 0.0
    %221 = vmatpush1.msra.mxu0 0.0
    %222 = vmatprep.subr.mxu0 0.0
    %223 = vmatpush1.msra.mxu0 0.0
    %224 = vmatprep.subr.mxu0 0.0
    %225 = vmatpush1.msra.mxu0 0.0
    %226 = vmatprep.subr.mxu0 0.0
    %227 = vmatpush1.msra.mxu0 0.0
    %228 = vmatprep.subr.mxu0 0.0
    %229 = vmatpush1.msra.mxu0 0.0
    %230 = vmatprep.subr.mxu0 0.0
    %231 = vmatpush1.msra.mxu0 0.0
    %232 = vmatprep.subr.mxu0 0.0
    %233 = vmatpush1.msra.mxu0 0.0
    %234 = vmatprep.subr.mxu0 0.0
    %235 = vmatpush1.msra.mxu0 0.0
    %236 = vmatprep.subr.mxu0 0.0
    %237 = vmatpush1.msra.mxu0 0.0
    %238 = vmatprep.subr.mxu0 0.0
    %239 = vmatpush1.msra.mxu0 0.0
    %240 = vmatprep.subr.mxu0 0.0
    %241 = vmatpush1.msra.mxu0 0.0
    %242 = vmatprep.subr.mxu0 0.0
    %243 = vmatpush1.msra.mxu0 0.0
    %244 = vmatprep.subr.mxu0 0.0
    %245 = vmatpush1.msra.mxu0 0.0
    %246 = vmatprep.subr.mxu0 0.0
    %247 = vmatpush1.msra.mxu0 0.0
    %248 = vmatprep.subr.mxu0 0.0
    %249 = vmatpush1.msra.mxu0 0.0
    %250 = vmatprep.subr.mxu0 0.0
    %251 = vmatpush1.msra.mxu0 0.0
    %252 = vmatprep.subr.mxu0 0.0
    %253 = vmatpush1.msra.mxu0 0.0
    %254 = vmatprep.subr.mxu0 0.0
    %255 = vmatpush1.msra.mxu0 0.0
    %256 = vmatprep.subr.mxu0 0.0
    %257 = vmatpush1.msra.mxu0 0.0
    %258 = vmatprep.subr.mxu0 0.0
    %259 = vmatpush1.msra.mxu0 0.0
    %260 = vmatprep.subr.mxu0 0.0
    %261 = vmatpush1.msra.mxu0 0.0
    %262 = vmatprep.subr.mxu0 0.0
    %263 = vmatpush1.msra.mxu0 0.0
    %264 = vmatprep.subr.mxu0 0.0
    %265 = vmatpush1.msra.mxu0 0.0
    %266 = vmatprep.subr.mxu0 0.0
    %267 = vmatpush1.msra.mxu0 0.0
    %268 = vmatprep.subr.mxu0 0.0
    %269 = vmatpush1.msra.mxu0 0.0
    %270 = vmatprep.subr.mxu0 0.0
    %271 = vmatpush1.msra.mxu0 0.0
    %272 = vmatprep.subr.mxu0 0.0
    %273 = vmatpush1.msra.mxu0 0.0
    %274 = vmatprep.subr.mxu0 0.0
    %275 = vmatpush1.msra.mxu0 0.0
    %276 = vmatprep.subr.mxu0 0.0
    %277 = vmatpush1.msra.mxu0 0.0
    %278 = vmatprep.mubr.f32.mxu0 0.0
    %279 = vmatmul.mubr.f32.gmra.mrb[0].mxu0 %v212
    %v280 = vpop.f32.mrb[0].mxu0
    %v281 = vadd.f32 0.0, %v280
    %v282 = vpop.f32.mrb[0].mxu0
    %283 = vdwg.mxu0
    %v284 = vadd.f32 %v205, %v281
    %v285 = vlaneseq
    %v286 = vshrl.u32 %v285, 7
    %v287 = vsub.s32 0, %v286
    %v288 = vrot.slane %v51, %v287
    %v289 = vadd.f32 %v284, %v288
    %v290 = vmax.f32 %v289, 0.0
    %v291 = vld [vmem:[%s6] sm:$0xff]
    %v292 = vld [vmem:[%s6 + $0x8] sm:$0xff]
    %v293 = vld [vmem:[%s6 + $0x10] sm:$0xff]
    %v294 = vld [vmem:[%s6 + $0x18] sm:$0xff]
    %v295 = vlaneseq
    %v296 = vshrl.u32 %v295, 7
    %v297 = vsub.s32 0, %v296
    %v298 = vrot.slane %v52, %v297
    %vm299 = vcmask 261120
    %v301 = vsel %vm299, %v290, 0
    %303 = vmatprep.subr.mxu0 0.0
    %304 = vmatpush1.msra.mxu0 %v291
    %305 = vmatprep.subr.mxu0 0.0
    %306 = vmatpush1.msra.mxu0 %v292
    %307 = vmatprep.subr.mxu0 0.0
    %308 = vmatpush1.msra.mxu0 %v293
    %309 = vmatprep.subr.mxu0 0.0
    %310 = vmatpush1.msra.mxu0 %v294
    %311 = vmatprep.subr.mxu0 0.0
    %312 = vmatpush1.msra.mxu0 0.0
    %313 = vmatprep.subr.mxu0 0.0
    %314 = vmatpush1.msra.mxu0 0.0
    %315 = vmatprep.subr.mxu0 0.0
    %316 = vmatpush1.msra.mxu0 0.0
    %317 = vmatprep.subr.mxu0 0.0
    %318 = vmatpush1.msra.mxu0 0.0
    %319 = vmatprep.subr.mxu0 0.0
    %320 = vmatpush1.msra.mxu0 0.0
    %321 = vmatprep.subr.mxu0 0.0
    %322 = vmatpush1.msra.mxu0 0.0
    %323 = vmatprep.subr.mxu0 0.0
    %324 = vmatpush1.msra.mxu0 0.0
    %325 = vmatprep.subr.mxu0 0.0
    %326 = vmatpush1.msra.mxu0 0.0
    %327 = vmatprep.subr.mxu0 0.0
    %328 = vmatpush1.msra.mxu0 0.0
    %329 = vmatprep.subr.mxu0 0.0
    %330 = vmatpush1.msra.mxu0 0.0
    %331 = vmatprep.subr.mxu0 0.0
    %332 = vmatpush1.msra.mxu0 0.0
    %333 = vmatprep.subr.mxu0 0.0
    %334 = vmatpush1.msra.mxu0 0.0
    %335 = vmatprep.subr.mxu0 0.0
    %336 = vmatpush1.msra.mxu0 0.0
    %337 = vmatprep.subr.mxu0 0.0
    %338 = vmatpush1.msra.mxu0 0.0
    %339 = vmatprep.subr.mxu0 0.0
    %340 = vmatpush1.msra.mxu0 0.0
    %341 = vmatprep.subr.mxu0 0.0
    %342 = vmatpush1.msra.mxu0 0.0
    %343 = vmatprep.subr.mxu0 0.0
    %344 = vmatpush1.msra.mxu0 0.0
    %345 = vmatprep.subr.mxu0 0.0
    %346 = vmatpush1.msra.mxu0 0.0
    %347 = vmatprep.subr.mxu0 0.0
    %348 = vmatpush1.msra.mxu0 0.0
    %349 = vmatprep.subr.mxu0 0.0
    %350 = vmatpush1.msra.mxu0 0.0
    %351 = vmatprep.subr.mxu0 0.0
    %352 = vmatpush1.msra.mxu0 0.0
    %353 = vmatprep.subr.mxu0 0.0
    %354 = vmatpush1.msra.mxu0 0.0
    %355 = vmatprep.subr.mxu0 0.0
    %356 = vmatpush1.msra.mxu0 0.0
    %357 = vmatprep.subr.mxu0 0.0
    %358 = vmatpush1.msra.mxu0 0.0
    %359 = vmatprep.subr.mxu0 0.0
    %360 = vmatpush1.msra.mxu0 0.0
    %361 = vmatprep.subr.mxu0 0.0
    %362 = vmatpush1.msra.mxu0 0.0
    %363 = vmatprep.subr.mxu0 0.0
    %364 = vmatpush1.msra.mxu0 0.0
    %365 = vmatprep.subr.mxu0 0.0
    %366 = vmatpush1.msra.mxu0 0.0
    %367 = vmatprep.mubr.f32.mxu0 0.0
    %368 = vmatmul.mubr.f32.gmra.mrb[0].mxu0 %v301
    %v369 = vpop.f32.mrb[0].mxu0
    %v370 = vadd.f32 %v298, %v369
    %v371 = vpop.f32.mrb[0].mxu0
    %372 = vdwg.mxu0
    %v373 = vmax.f32 %v370, 0.0
    %v374 = vld [vmem:[%s7] sm:$0xff]
    %v375 = vld [vmem:[%s7 + $0x8] sm:$0xff]
    %v376 = vld [vmem:[%s7 + $0x10] sm:$0xff]
    %v377 = vld [vmem:[%s7 + $0x18] sm:$0xff]
    %v378 = vlaneseq
    %v379 = vshrl.u32 %v378, 7
    %v380 = vsub.s32 0, %v379
    %v381 = vrot.slane %v53, %v380
    %v383 = vsel %vm299, %v373, 0
    %385 = vmatprep.subr.mxu0 0.0
    %386 = vmatpush1.msra.mxu0 %v374
    %387 = vmatprep.subr.mxu0 0.0
    %388 = vmatpush1.msra.mxu0 %v375
    %389 = vmatprep.subr.mxu0 0.0
    %390 = vmatpush1.msra.mxu0 %v376
    %391 = vmatprep.subr.mxu0 0.0
    %392 = vmatpush1.msra.mxu0 %v377
    %393 = vmatprep.subr.mxu0 0.0
    %394 = vmatpush1.msra.mxu0 0.0
    %395 = vmatprep.subr.mxu0 0.0
    %396 = vmatpush1.msra.mxu0 0.0
    %397 = vmatprep.subr.mxu0 0.0
    %398 = vmatpush1.msra.mxu0 0.0
    %399 = vmatprep.subr.mxu0 0.0
    %400 = vmatpush1.msra.mxu0 0.0
    %401 = vmatprep.subr.mxu0 0.0
    %402 = vmatpush1.msra.mxu0 0.0
    %403 = vmatprep.subr.mxu0 0.0
    %404 = vmatpush1.msra.mxu0 0.0
    %405 = vmatprep.subr.mxu0 0.0
    %406 = vmatpush1.msra.mxu0 0.0
    %407 = vmatprep.subr.mxu0 0.0
    %408 = vmatpush1.msra.mxu0 0.0
    %409 = vmatprep.subr.mxu0 0.0
    %410 = vmatpush1.msra.mxu0 0.0
    %411 = vmatprep.subr.mxu0 0.0
    %412 = vmatpush1.msra.mxu0 0.0
    %413 = vmatprep.subr.mxu0 0.0
    %414 = vmatpush1.msra.mxu0 0.0
    %415 = vmatprep.subr.mxu0 0.0
    %416 = vmatpush1.msra.mxu0 0.0
    %417 = vmatprep.subr.mxu0 0.0
    %418 = vmatpush1.msra.mxu0 0.0
    %419 = vmatprep.subr.mxu0 0.0
    %420 = vmatpush1.msra.mxu0 0.0
    %421 = vmatprep.subr.mxu0 0.0
    %422 = vmatpush1.msra.mxu0 0.0
    %423 = vmatprep.subr.mxu0 0.0
    %424 = vmatpush1.msra.mxu0 0.0
    %425 = vmatprep.subr.mxu0 0.0
    %426 = vmatpush1.msra.mxu0 0.0
    %427 = vmatprep.subr.mxu0 0.0
    %428 = vmatpush1.msra.mxu0 0.0
    %429 = vmatprep.subr.mxu0 0.0
    %430 = vmatpush1.msra.mxu0 0.0
    %431 = vmatprep.subr.mxu0 0.0
    %432 = vmatpush1.msra.mxu0 0.0
    %433 = vmatprep.subr.mxu0 0.0
    %434 = vmatpush1.msra.mxu0 0.0
    %435 = vmatprep.subr.mxu0 0.0
    %436 = vmatpush1.msra.mxu0 0.0
    %437 = vmatprep.subr.mxu0 0.0
    %438 = vmatpush1.msra.mxu0 0.0
    %439 = vmatprep.subr.mxu0 0.0
    %440 = vmatpush1.msra.mxu0 0.0
    %441 = vmatprep.subr.mxu0 0.0
    %442 = vmatpush1.msra.mxu0 0.0
    %443 = vmatprep.subr.mxu0 0.0
    %444 = vmatpush1.msra.mxu0 0.0
    %445 = vmatprep.subr.mxu0 0.0
    %446 = vmatpush1.msra.mxu0 0.0
    %447 = vmatprep.subr.mxu0 0.0
    %448 = vmatpush1.msra.mxu0 0.0
    %449 = vmatprep.mubr.f32.mxu0 0.0
    %450 = vmatmul.mubr.f32.gmra.mrb[0].mxu0 %v383
    %v451 = vpop.f32.mrb[0].mxu0
    %v452 = vadd.f32 %v381, %v451
    %v453 = vpop.f32.mrb[0].mxu0
    %454 = vdwg.mxu0
    %455 = vst.msk [vmem:[#allocation5] sm:$0xff] %vm61, %v452
    %v456 = vld [vmem:[%s8] sm:$0xff]
    %v457 = vld [vmem:[%s8 + $0x8] sm:$0xff]
    %v458 = vld [vmem:[%s8 + $0x10] sm:$0xff]
    %v459 = vld [vmem:[%s8 + $0x18] sm:$0xff]
    %v460 = vlaneseq
    %v461 = vshrl.u32 %v460, 7
    %v462 = vsub.s32 0, %v461
    %v463 = vrot.slane %v54, %v462
    %464 = vmatprep.subr.mxu0 0.0
    %465 = vmatpush1.msra.mxu0 %v456
    %466 = vmatprep.subr.mxu0 0.0
    %467 = vmatpush1.msra.mxu0 %v457
    %468 = vmatprep.subr.mxu0 0.0
    %469 = vmatpush1.msra.mxu0 %v458
    %470 = vmatprep.subr.mxu0 0.0
    %471 = vmatpush1.msra.mxu0 %v459
    %472 = vmatprep.subr.mxu0 0.0
    %473 = vmatpush1.msra.mxu0 0.0
    %474 = vmatprep.subr.mxu0 0.0
    %475 = vmatpush1.msra.mxu0 0.0
    %476 = vmatprep.subr.mxu0 0.0
    %477 = vmatpush1.msra.mxu0 0.0
    %478 = vmatprep.subr.mxu0 0.0
    %479 = vmatpush1.msra.mxu0 0.0
    %480 = vmatprep.subr.mxu0 0.0
    %481 = vmatpush1.msra.mxu0 0.0
    %482 = vmatprep.subr.mxu0 0.0
    %483 = vmatpush1.msra.mxu0 0.0
    %484 = vmatprep.subr.mxu0 0.0
    %485 = vmatpush1.msra.mxu0 0.0
    %486 = vmatprep.subr.mxu0 0.0
    %487 = vmatpush1.msra.mxu0 0.0
    %488 = vmatprep.subr.mxu0 0.0
    %489 = vmatpush1.msra.mxu0 0.0
    %490 = vmatprep.subr.mxu0 0.0
    %491 = vmatpush1.msra.mxu0 0.0
    %492 = vmatprep.subr.mxu0 0.0
    %493 = vmatpush1.msra.mxu0 0.0
    %494 = vmatprep.subr.mxu0 0.0
    %495 = vmatpush1.msra.mxu0 0.0
    %496 = vmatprep.subr.mxu0 0.0
    %497 = vmatpush1.msra.mxu0 0.0
    %498 = vmatprep.subr.mxu0 0.0
    %499 = vmatpush1.msra.mxu0 0.0
    %500 = vmatprep.subr.mxu0 0.0
    %501 = vmatpush1.msra.mxu0 0.0
    %502 = vmatprep.subr.mxu0 0.0
    %503 = vmatpush1.msra.mxu0 0.0
    %504 = vmatprep.subr.mxu0 0.0
    %505 = vmatpush1.msra.mxu0 0.0
    %506 = vmatprep.subr.mxu0 0.0
    %507 = vmatpush1.msra.mxu0 0.0
    %508 = vmatprep.subr.mxu0 0.0
    %509 = vmatpush1.msra.mxu0 0.0
    %510 = vmatprep.subr.mxu0 0.0
    %511 = vmatpush1.msra.mxu0 0.0
    %512 = vmatprep.subr.mxu0 0.0
    %513 = vmatpush1.msra.mxu0 0.0
    %514 = vmatprep.subr.mxu0 0.0
    %515 = vmatpush1.msra.mxu0 0.0
    %516 = vmatprep.subr.mxu0 0.0
    %517 = vmatpush1.msra.mxu0 0.0
    %518 = vmatprep.subr.mxu0 0.0
    %519 = vmatpush1.msra.mxu0 0.0
    %520 = vmatprep.subr.mxu0 0.0
    %521 = vmatpush1.msra.mxu0 0.0
    %522 = vmatprep.subr.mxu0 0.0
    %523 = vmatpush1.msra.mxu0 0.0
    %524 = vmatprep.subr.mxu0 0.0
    %525 = vmatpush1.msra.mxu0 0.0
    %526 = vmatprep.subr.mxu0 0.0
    %527 = vmatpush1.msra.mxu0 0.0
    %528 = vmatprep.mubr.f32.mxu0 0.0
    %529 = vmatmul.mubr.f32.gmra.mrb[0].mxu0 %v383
    %v530 = vpop.f32.mrb[0].mxu0
    %v531 = vadd.f32 %v463, %v530
    %v532 = vpop.f32.mrb[0].mxu0
    %533 = vdwg.mxu0
    %v534 = vmax.f32 %v531, 0.0
    %535 = vst.msk [vmem:[#allocation6] sm:$0xff] %vm61, %v534
    // Predicated region
    $region46: #{forward_model_sigma_input_output.1} parent=1 // pred_check
      _
    $region47: #{forward_model_sigma_input_output.1} parent=1 // pred_check_branch
      %537 = sbr.rel (0) target = $region49
    $region48: #{forward_model_sigma_input_output.1} parent=1 // pred_region
      %s539 = ssub.s32 128, 128
      %540 = vsyncadd [#allocation4], %s539
      %s542 = sshll.u32 [#allocation5], 4
      %s543 = int_to_ptr.vmem [resolvable:$true] %s542
      %545 = dma.vmem_to_hbm [thread:$0]  %s543, 128, %s10, [#allocation4]
    $region49: #{forward_model_sigma_input_output.1} parent=1 // pred_fallthru
      _
    // Predicated region
    $region50: #{forward_model_sigma_input_output.1} parent=1 // pred_check
      _
    $region51: #{forward_model_sigma_input_output.1} parent=1 // pred_check_branch
      %547 = sbr.rel (0) target = $region53
    $region52: #{forward_model_sigma_input_output.1} parent=1 // pred_region
      %s549 = ssub.s32 128, 128
      %550 = vsyncadd [#allocation7], %s549
      %s552 = sshll.u32 [#allocation6], 4
      %s553 = int_to_ptr.vmem [resolvable:$true] %s552
      %555 = dma.vmem_to_hbm [thread:$0]  %s553, 128, %s11, [#allocation7]
    $region53: #{forward_model_sigma_input_output.1} parent=1 // pred_fallthru
      _
    // Predicated region
    $region54: #{forward_model_sigma_input_output.1} parent=1 // pred_check
      _
    $region55: #{forward_model_sigma_input_output.1} parent=1 // pred_check_branch
      %557 = sbr.rel (0) target = $region57
    $region56: #{forward_model_sigma_input_output.1} parent=1 // pred_region
      %558 = dma.done [#allocation4], 128
    $region57: #{forward_model_sigma_input_output.1} parent=1 // pred_fallthru
      _
    // Predicated region
    $region58: #{forward_model_sigma_input_output.1} parent=1 // pred_check
      _
    $region59: #{forward_model_sigma_input_output.1} parent=1 // pred_check_branch
      %560 = sbr.rel (0) target = $region61
    $region60: #{forward_model_sigma_input_output.1} parent=1 // pred_region
      %561 = dma.done [#allocation7], 128
    $region61: #{forward_model_sigma_input_output.1} parent=1 // pred_fallthru
      _
    %562 = vsyncpa [#allocation3], 1
    %563 = vsyncpa [#allocation4], 1
    %564 = vsyncpa [#allocation7], 1

</llo_original>
